<compile_context>
chip_gen: v7x
topology: tpu7x:2x2x1
jax: 0.10.0
libtpu: 0.0.40
codegen_flags: <defaults>
</compile_context>

<pallas_src>
import jax
import jax.numpy as jnp
from jax.experimental import pallas as pl
from jax.experimental.pallas import tpu as pltpu


def _round_up(x, m):
    return ((x + m - 1) // m) * m


def _vmem_capacity_bytes():
    try:
        return int(pltpu.get_tpu_info().vmem_capacity_bytes)
    except Exception:
        return 64 << 20          # conservative (v7x-sized) fallback


def _choose_time_tile(L, B, K, Nout, io_budget_bytes):
    """Largest time tile (multiple of 8, <=2048) whose double-buffered IO fits the
    budget, while keeping >=2 grid steps when possible (v7x megacore)."""
    tt = min(2048, _round_up(max(L, 8), 8))

    def io(t):  # double-buffered: bf16 input tile + f32 output tile
        return 2 * ((t + 2) * K * 2 + t * Nout * 4)

    while tt > 8 and io(tt) > io_budget_bytes:
        tt = max(8, _round_up(tt // 2, 8))
    while tt > 8 and B * ((L + tt - 1) // tt) < 2:
        tt = max(8, _round_up((tt + 1) // 2, 8))
    return tt


def _tcn_decoder_kernel(x_ref, w_c_ref, w_p_ref, w_n_ref, b_ref, o_ref):
    # x_ref : (1, tt+2, Cin) bf16 halo'd input rows [t-1 .. t+tt] for this tile
    # w_*   : (Cin, Nout) f32 folded taps, lanes packed as [even || odd]
    # b_ref : (1, Nout) f32 packed bias; o_ref: (1, tt, Nout) f32
    tt = o_ref.shape[1]
    xw = x_ref[0].astype(jnp.float32)          # single HBM read per row, f32 compute
    xp = xw[0:tt, :]                           # x[t-1]
    xc = xw[1:tt + 1, :]                       # x[t]
    xn = xw[2:tt + 2, :]                       # x[t+1]
    y = (jnp.dot(xc, w_c_ref[...], preferred_element_type=jnp.float32)
         + jnp.dot(xp, w_p_ref[...], preferred_element_type=jnp.float32)
         + jnp.dot(xn, w_n_ref[...], preferred_element_type=jnp.float32)
         + b_ref[...])
    o_ref[0] = jnp.maximum(y, 0.0).astype(o_ref.dtype)


def tcn_decoder_forward(x, weight, bias, *, time_tile=None):
    """TCNDecoder forward.

    x:      (B, C_in, L) float32
    weight: (C_in, C_out, 3)   -- PyTorch ConvTranspose1d weight layout
    bias:   (C_out,)
    returns (B, C_out, 2*L) float32
    """
    B, Cin, L = x.shape
    Cout = weight.shape[1]
    K = Cin
    Nout = _round_up(2 * Cout, 128)            # [even || odd] packed on lanes

    # ---- fold upsample + conv-transpose taps into 3 lane-packed matmul weights ----
    w0 = weight[:, :, 0].astype(jnp.float32)
    w1 = weight[:, :, 1].astype(jnp.float32)
    w2 = weight[:, :, 2].astype(jnp.float32)

    def pack(even_tap, odd_tap):               # (K, Cout) x2 -> (K, Nout)
        w = jnp.concatenate([even_tap, odd_tap], axis=1)
        return jnp.pad(w, ((0, 0), (0, Nout - 2 * Cout)))

    w_c = pack(w0 + w1, w1 + w2)               # coefficient of x[t]   (even || odd)
    w_p = pack(w2, jnp.zeros_like(w2))         # coefficient of x[t-1] (even only)
    w_n = pack(jnp.zeros_like(w0), w0)         # coefficient of x[t+1] (odd only)
    b_pk = jnp.pad(jnp.concatenate([bias, bias]).astype(jnp.float32),
                   (0, Nout - 2 * Cout)).reshape(1, Nout)

    # ---- tiling / VMEM budget (generation-aware) ----
    vmem_cap = _vmem_capacity_bytes()
    resident = (3 * K * Nout + Nout) * 4
    io_budget = max(2 << 20, vmem_cap // 2 - 2 * resident)
    tt = time_tile if time_tile is not None else _choose_time_tile(L, B, K, Nout, io_budget)
    n_t = (L + tt - 1) // tt
    Lp = n_t * tt
    G = B * n_t
    vmem_limit = int(vmem_cap * 3 // 4)        # ~48 MiB on v7x, ~96 MiB on v5e/v6e

    # ---- single halo'd, channels-last, bf16 input: (G, tt+2, Cin) ----
    # Per-batch zero halos at t=-1 and t>=L come from the pad, so there is no
    # cross-batch leakage and no x_prev/x_next copies in HBM.
    xt = jnp.transpose(x, (0, 2, 1)).astype(jnp.bfloat16)          # (B, L, Cin)
    x_pad = jnp.pad(xt, ((0, 0), (1, Lp - L + 1), (0, 0)))         # (B, Lp+2, Cin)
    x_main = x_pad[:, :Lp, :].reshape(B, n_t, tt, K)               # rows [i*tt, i*tt+tt)
    extra_idx = jnp.arange(n_t)[:, None] * tt + tt + jnp.arange(2)[None, :]
    x_extra = x_pad[:, extra_idx, :]                               # rows i*tt+tt, i*tt+tt+1
    x_tiles = jnp.concatenate([x_main, x_extra], axis=2).reshape(G, tt + 2, K)

    cost = pl.CostEstimate(
        flops=2 * G * tt * K * Nout * 3,
        transcendentals=0,
        bytes_accessed=G * (tt + 2) * K * 2 + G * tt * Nout * 4 + resident,
    )

    out = pl.pallas_call(
        _tcn_decoder_kernel,
        out_shape=jax.ShapeDtypeStruct((G, tt, Nout), jnp.float32),
        grid_spec=pltpu.PrefetchScalarGridSpec(
            num_scalar_prefetch=0,
            grid=(G,),
            in_specs=[
                pl.BlockSpec((1, tt + 2, K), lambda g: (g, 0, 0)),   # halo'd x tile
                pl.BlockSpec((K, Nout), lambda g: (0, 0)),           # w_c (resident)
                pl.BlockSpec((K, Nout), lambda g: (0, 0)),           # w_p (resident)
                pl.BlockSpec((K, Nout), lambda g: (0, 0)),           # w_n (resident)
                pl.BlockSpec((1, Nout), lambda g: (0, 0)),           # bias (resident)
            ],
            out_specs=pl.BlockSpec((1, tt, Nout), lambda g: (g, 0, 0)),
        ),
        compiler_params=pltpu.CompilerParams(
            dimension_semantics=("parallel",),
            vmem_limit_bytes=vmem_limit,
        ),
        cost_estimate=cost,
    )(x_tiles, w_c, w_p, w_n, b_pk)

    # (G, tt, Nout) -> (B, Lp, Nout) -> trim -> interleave even/odd -> NCL.
    # NOTE: the module contract is channels-first (B, Cout, 2L); if downstream
    # accepted channels-last, this final transpose (one full-output copy) could go.
    y = out.reshape(B, Lp, Nout)[:, :L, :2 * Cout]
    y = y.reshape(B, L, 2, Cout).reshape(B, 2 * L, Cout)
    return jnp.transpose(y, (0, 2, 1))


if __name__ == "__main__":
    batch, input_dim, output_dim, seq_len = 2, 32, 32, 16

    key = jax.random.PRNGKey(0)
    kx, kw, kb = jax.random.split(key, 3)

    x = jax.random.normal(kx, (batch, input_dim, seq_len), dtype=jnp.float32)
    bound = 1.0 / ((input_dim * 3) ** 0.5)   # mimic ConvTranspose1d uniform init bounds
    weight = jax.random.uniform(kw, (input_dim, output_dim, 3), jnp.float32, -bound, bound)
    bias = jax.random.uniform(kb, (output_dim,), jnp.float32, -bound, bound)

    fwd = jax.jit(tcn_decoder_forward)
    y = jax.block_until_ready(fwd(x, weight, bias))

    # Pure-JAX reference of the PyTorch forward:
    #   Upsample(nearest x2) -> ConvTranspose1d(k=3, stride=1, pad=1) -> ReLU
    def reference(x, weight, bias):
        xu = jnp.repeat(x, 2, axis=-1)                      # (B, Cin, 2L)
        Lout = xu.shape[-1]
        xu_pad = jnp.pad(xu, ((0, 0), (0, 0), (1, 1)))
        y = bias[None, :, None]
        for k in range(3):                                  # y[s] += Wk . x_up[s+1-k]
            seg = jax.lax.dynamic_slice_in_dim(xu_pad, 2 - k, Lout, axis=2)
            y = y + jnp.einsum('bcl,co->bol', seg, weight[:, :, k])
        return jnp.maximum(y, 0.0)

    ref = reference(x, weight, bias)
    assert y.shape == (batch, output_dim, 2 * seq_len), y.shape
    # Tolerance covers the bf16 storage of x (per perf guidance: memory-bound kernel)
    # plus the MXU's default f32-matmul precision.
    err = float(jnp.max(jnp.abs(y - ref)))
    assert jnp.allclose(y, ref, atol=2e-2, rtol=2e-2), err

    print("KERNEL_OK")
</pallas_src>

<mosaic_0001>
module attributes {stable_mosaic.version = 11 : i64} {
  func.func @_tcn_decoder_kernel(%arg0: i32, %arg1: memref<1x18x32xbf16, #tpu.memory_space<vmem>>, %arg2: memref<32x128xf32, #tpu.memory_space<vmem>>, %arg3: memref<32x128xf32, #tpu.memory_space<vmem>>, %arg4: memref<32x128xf32, #tpu.memory_space<vmem>>, %arg5: memref<1x128xf32, #tpu.memory_space<vmem>>, %arg6: memref<1x16x128xf32, #tpu.memory_space<vmem>>) attributes {dimension_semantics = [#tpu.dimension_semantics<parallel>], iteration_bounds = array<i64: 2>, scalar_prefetch = 0 : i64, scratch_operands = 0 : i64, tpu.core_type = #tpu.core_type<tc>, window_params = [{transform_indices = @transform_0, window_bounds = array<i64: 1, 18, 32>}, {pipeline_mode = #tpu.pipeline_mode<synchronous>, transform_indices = @transform_1, window_bounds = array<i64: 32, 128>}, {pipeline_mode = #tpu.pipeline_mode<synchronous>, transform_indices = @transform_2, window_bounds = array<i64: 32, 128>}, {pipeline_mode = #tpu.pipeline_mode<synchronous>, transform_indices = @transform_3, window_bounds = array<i64: 32, 128>}, {pipeline_mode = #tpu.pipeline_mode<synchronous>, transform_indices = @transform_4, window_bounds = array<i64: 1, 128>}, {transform_indices = @transform_5, window_bounds = array<i64: 1, 16, 128>}]} {
    %c0 = arith.constant 0 : index
    %c0_0 = arith.constant 0 : index
    %c0_1 = arith.constant 0 : index
    %0 = vector.load %arg1[%c0, %c0_0, %c0_1] : memref<1x18x32xbf16, #tpu.memory_space<vmem>>, vector<1x18x32xbf16>
    %1 = vector.shape_cast %0 : vector<1x18x32xbf16> to vector<18x32xbf16>
    %2 = arith.extf %1 : vector<18x32xbf16> to vector<18x32xf32>
    %3 = vector.extract_strided_slice %2 {offsets = [0, 0], sizes = [16, 32], strides = [1, 1]} : vector<18x32xf32> to vector<16x32xf32>
    %4 = vector.extract_strided_slice %2 {offsets = [1, 0], sizes = [16, 32], strides = [1, 1]} : vector<18x32xf32> to vector<16x32xf32>
    %5 = vector.extract_strided_slice %2 {offsets = [2, 0], sizes = [16, 32], strides = [1, 1]} : vector<18x32xf32> to vector<16x32xf32>
    %c0_2 = arith.constant 0 : index
    %c0_3 = arith.constant 0 : index
    %6 = vector.load %arg2[%c0_2, %c0_3] : memref<32x128xf32, #tpu.memory_space<vmem>>, vector<32x128xf32>
    %cst = arith.constant dense<0.000000e+00> : vector<16x128xf32>
    %7 = tpu.matmul %4, %6, %cst {dimension_numbers = #tpu.dot_dimension_numbers<[1], [0], [0], [1], [0, 0, 1, 1], [], []>} : vector<16x32xf32>, vector<32x128xf32>, vector<16x128xf32> -> vector<16x128xf32>
    %c0_4 = arith.constant 0 : index
    %c0_5 = arith.constant 0 : index
    %8 = vector.load %arg3[%c0_4, %c0_5] : memref<32x128xf32, #tpu.memory_space<vmem>>, vector<32x128xf32>
    %cst_6 = arith.constant dense<0.000000e+00> : vector<16x128xf32>
    %9 = tpu.matmul %3, %8, %cst_6 {dimension_numbers = #tpu.dot_dimension_numbers<[1], [0], [0], [1], [0, 0, 1, 1], [], []>} : vector<16x32xf32>, vector<32x128xf32>, vector<16x128xf32> -> vector<16x128xf32>
    %10 = arith.addf %7, %9 : vector<16x128xf32>
    %c0_7 = arith.constant 0 : index
    %c0_8 = arith.constant 0 : index
    %11 = vector.load %arg4[%c0_7, %c0_8] : memref<32x128xf32, #tpu.memory_space<vmem>>, vector<32x128xf32>
    %cst_9 = arith.constant dense<0.000000e+00> : vector<16x128xf32>
    %12 = tpu.matmul %5, %11, %cst_9 {dimension_numbers = #tpu.dot_dimension_numbers<[1], [0], [0], [1], [0, 0, 1, 1], [], []>} : vector<16x32xf32>, vector<32x128xf32>, vector<16x128xf32> -> vector<16x128xf32>
    %13 = arith.addf %10, %12 : vector<16x128xf32>
    %c0_10 = arith.constant 0 : index
    %c0_11 = arith.constant 0 : index
    %14 = vector.load %arg5[%c0_10, %c0_11] : memref<1x128xf32, #tpu.memory_space<vmem>>, vector<1x128xf32>
    %15 = vector.broadcast %14 : vector<1x128xf32> to vector<16x128xf32>
    %16 = arith.addf %13, %15 : vector<16x128xf32>
    %cst_12 = arith.constant 0.000000e+00 : f32
    %17 = vector.broadcast %cst_12 : f32 to vector<16x128xf32>
    %18 = arith.maximumf %16, %17 : vector<16x128xf32>
    %c0_13 = arith.constant 0 : index
    %c0_14 = arith.constant 0 : index
    %c0_15 = arith.constant 0 : index
    %19 = vector.load %arg6[%c0_13, %c0_14, %c0_15] : memref<1x16x128xf32, #tpu.memory_space<vmem>>, vector<1x16x128xf32>
    %20 = vector.shape_cast %19 : vector<1x16x128xf32> to vector<16x128xf32>
    %21 = vector.shape_cast %18 : vector<16x128xf32> to vector<1x16x128xf32>
    tpu.vector_store %arg6[%c0_13, %c0_14, %c0_15], %21 {strides = array<i32>} : memref<1x16x128xf32, #tpu.memory_space<vmem>>, vector<1x16x128xf32>,
    return
  }
  func.func @transform_0(%arg0: i32) -> (i32, i32, i32) {
    %c0_i32 = arith.constant 0 : i32
    %c0_i32_0 = arith.constant 0 : i32
    %c0_i32_1 = arith.constant 0 : i32
    return %arg0, %c0_i32, %c0_i32_0 : i32, i32, i32
  }
  func.func @transform_1(%arg0: i32) -> (i32, i32) {
    %c0_i32 = arith.constant 0 : i32
    %c0_i32_0 = arith.constant 0 : i32
    %c0_i32_1 = arith.constant 0 : i32
    return %c0_i32, %c0_i32_0 : i32, i32
  }
  func.func @transform_2(%arg0: i32) -> (i32, i32) {
    %c0_i32 = arith.constant 0 : i32
    %c0_i32_0 = arith.constant 0 : i32
    %c0_i32_1 = arith.constant 0 : i32
    return %c0_i32, %c0_i32_0 : i32, i32
  }
  func.func @transform_3(%arg0: i32) -> (i32, i32) {
    %c0_i32 = arith.constant 0 : i32
    %c0_i32_0 = arith.constant 0 : i32
    %c0_i32_1 = arith.constant 0 : i32
    return %c0_i32, %c0_i32_0 : i32, i32
  }
  func.func @transform_4(%arg0: i32) -> (i32, i32) {
    %c0_i32 = arith.constant 0 : i32
    %c0_i32_0 = arith.constant 0 : i32
    %c0_i32_1 = arith.constant 0 : i32
    return %c0_i32, %c0_i32_0 : i32, i32
  }
  func.func @transform_5(%arg0: i32) -> (i32, i32, i32) {
    %c0_i32 = arith.constant 0 : i32
    %c0_i32_0 = arith.constant 0 : i32
    %c0_i32_1 = arith.constant 0 : i32
    return %arg0, %c0_i32, %c0_i32_0 : i32, i32, i32
  }
}

</mosaic_0001>

<llo_original>
// kernel: tcn_decoder_forward.1
$region0: #{tcn_decoder_forward.1}
  #allocation0 [shape = 'u32[]', space=smem, size = 0x4, offset = 0x4, fixed_abs, tag = 'smem constant byte address 0x4 - core index']
  #allocation1 [shape = 'u32[144,128]{1,0:T(1,128)}', space=vmem, size = 0x12000, scoped, tag = 'internal scratch']
  %s0 = inlined_call_operand.vmem [shape: bf16[2,18,32], index: 0, kind: input, shape index: {}]
  %s1 = inlined_call_operand.vmem [shape: f32[32,128], index: 1, kind: input, shape index: {}]
  %s2 = inlined_call_operand.vmem [shape: f32[32,128], index: 2, kind: input, shape index: {}]
  %s3 = inlined_call_operand.vmem [shape: f32[32,128], index: 3, kind: input, shape index: {}]
  %s4 = inlined_call_operand.vmem [shape: f32[1,128], index: 4, kind: input, shape index: {}]
  %s5 = inlined_call_operand.vmem [shape: f32[2,16,128], index: 5, kind: output, shape index: {}]
  %s6 = sld [smem:[#allocation0]]
  $region53: #{tcn_decoder_forward.1} parent=0
    _
  %s8 = ssub.s32 1, %s6
  %s9 = scalar_select 0, %s8, %s6
  loop: start=0, step=1, limit=4
  $region2: #{tcn_decoder_forward.1} parent=0 // loop_pre_header
    _
  $region3: #{tcn_decoder_forward.1} parent=0 // loop_header
    %s11 = sphi 0, %s15
    %p12 = scmp.ge.s32.totalorder %s11, 4
    %s21 = sphi 0, %s23
    %s24 = sphi 0, %s21
    %s25 = sphi 0, %s24
    %s41 = sphi 0, %s25
    %s45 = sphi 0, %s45
    %s47 = sphi 0, %s45
    %s48 = sphi 0, %s47
    %s62 = sphi 0, %s48
    %s66 = sphi 0, %s66
    %s68 = sphi 0, %s66
    %s69 = sphi 0, %s68
    %s83 = sphi 0, %s69
    %s87 = sphi 0, %s87
    %s89 = sphi 0, %s87
    %s90 = sphi 0, %s89
    %s104 = sphi 0, %s90
    %s108 = sphi 0, %s108
    %s110 = sphi 0, %s108
    %s111 = sphi 0, %s110
    %s125 = sphi 0, %s111
    %s131 = sphi 0, %s133
    %s134 = sphi 0, %s131
    %s135 = sphi 0, %s134
    %s151 = sphi 0, %s135
  $region4: #{tcn_decoder_forward.1} parent=0 // loop_header_branch
    %14 = sbr.rel (%p12) target = $region8
  $region5: #{tcn_decoder_forward.1} parent=0 // loop_body
    %s16 = ssub.s32 %s11, 1
    %s17 = ssub.s32 %s11, 2
    %s18 = sadd.s32 %s11, 1
    %s19 = ssub.s32 %s11, %s18
    %p20 = scmp.eq.s32.totalorder %s19, 0
    %s22 = sadd.s32 %s21, 1
    %s23 = scalar_select %p20, %s21, %s22
    %p26 = pneg %p20
    %p27 = scmp.eq.s32.totalorder %s11, 1
    %p28 = por %p26, %p27
    %p29 = scmp.ne.s32.totalorder %s21, %s24
    %p30 = scmp.eq.s32.totalorder %s11, 0
    %p31 = por %p29, %p30
    %p32 = scmp.ne.s32.totalorder %s21, %s24
    %p33 = scmp.eq.s32.totalorder %s16, 1
    %p34 = por %p32, %p33
    %p35 = scmp.ne.s32.totalorder %s24, %s25
    %p36 = scmp.eq.s32.totalorder %s16, 0
    %p37 = por %p35, %p36
    %p38 = scmp.ne.s32.totalorder %s24, %s25
    %p39 = scmp.eq.s32.totalorder %s17, 1
    %p40 = por %p38, %p39
    %p42 = scmp.ne.s32.totalorder %s25, %s41
    %p43 = scmp.eq.s32.totalorder %s17, 0
    %p44 = por %p42, %p43
    %s46 = sadd.s32 %s45, 1
    %p49 = scmp.eq.s32.totalorder %s11, 1
    %p50 = scmp.ne.s32.totalorder %s45, %s47
    %p51 = scmp.eq.s32.totalorder %s11, 0
    %p52 = por %p50, %p51
    %p53 = scmp.ne.s32.totalorder %s45, %s47
    %p54 = scmp.eq.s32.totalorder %s16, 1
    %p55 = por %p53, %p54
    %p56 = scmp.ne.s32.totalorder %s47, %s48
    %p57 = scmp.eq.s32.totalorder %s16, 0
    %p58 = por %p56, %p57
    %p59 = scmp.ne.s32.totalorder %s47, %s48
    %p60 = scmp.eq.s32.totalorder %s17, 1
    %p61 = por %p59, %p60
    %p63 = scmp.ne.s32.totalorder %s48, %s62
    %p64 = scmp.eq.s32.totalorder %s17, 0
    %p65 = por %p63, %p64
    %s67 = sadd.s32 %s66, 1
    %p70 = scmp.eq.s32.totalorder %s11, 1
    %p71 = scmp.ne.s32.totalorder %s66, %s68
    %p72 = scmp.eq.s32.totalorder %s11, 0
    %p73 = por %p71, %p72
    %p74 = scmp.ne.s32.totalorder %s66, %s68
    %p75 = scmp.eq.s32.totalorder %s16, 1
    %p76 = por %p74, %p75
    %p77 = scmp.ne.s32.totalorder %s68, %s69
    %p78 = scmp.eq.s32.totalorder %s16, 0
    %p79 = por %p77, %p78
    %p80 = scmp.ne.s32.totalorder %s68, %s69
    %p81 = scmp.eq.s32.totalorder %s17, 1
    %p82 = por %p80, %p81
    %p84 = scmp.ne.s32.totalorder %s69, %s83
    %p85 = scmp.eq.s32.totalorder %s17, 0
    %p86 = por %p84, %p85
    %s88 = sadd.s32 %s87, 1
    %p91 = scmp.eq.s32.totalorder %s11, 1
    %p92 = scmp.ne.s32.totalorder %s87, %s89
    %p93 = scmp.eq.s32.totalorder %s11, 0
    %p94 = por %p92, %p93
    %p95 = scmp.ne.s32.totalorder %s87, %s89
    %p96 = scmp.eq.s32.totalorder %s16, 1
    %p97 = por %p95, %p96
    %p98 = scmp.ne.s32.totalorder %s89, %s90
    %p99 = scmp.eq.s32.totalorder %s16, 0
    %p100 = por %p98, %p99
    %p101 = scmp.ne.s32.totalorder %s89, %s90
    %p102 = scmp.eq.s32.totalorder %s17, 1
    %p103 = por %p101, %p102
    %p105 = scmp.ne.s32.totalorder %s90, %s104
    %p106 = scmp.eq.s32.totalorder %s17, 0
    %p107 = por %p105, %p106
    %s109 = sadd.s32 %s108, 1
    %p112 = scmp.eq.s32.totalorder %s11, 1
    %p113 = scmp.ne.s32.totalorder %s108, %s110
    %p114 = scmp.eq.s32.totalorder %s11, 0
    %p115 = por %p113, %p114
    %p116 = scmp.ne.s32.totalorder %s108, %s110
    %p117 = scmp.eq.s32.totalorder %s16, 1
    %p118 = por %p116, %p117
    %p119 = scmp.ne.s32.totalorder %s110, %s111
    %p120 = scmp.eq.s32.totalorder %s16, 0
    %p121 = por %p119, %p120
    %p122 = scmp.ne.s32.totalorder %s110, %s111
    %p123 = scmp.eq.s32.totalorder %s17, 1
    %p124 = por %p122, %p123
    %p126 = scmp.ne.s32.totalorder %s111, %s125
    %p127 = scmp.eq.s32.totalorder %s17, 0
    %p128 = por %p126, %p127
    %s129 = ssub.s32 %s11, %s18
    %p130 = scmp.eq.s32.totalorder %s129, 0
    %s132 = sadd.s32 %s131, 1
    %s133 = scalar_select %p130, %s131, %s132
    %p136 = pneg %p130
    %p137 = scmp.eq.s32.totalorder %s11, 1
    %p138 = por %p136, %p137
    %p139 = scmp.ne.s32.totalorder %s131, %s134
    %p140 = scmp.eq.s32.totalorder %s11, 0
    %p141 = por %p139, %p140
    %p142 = scmp.ne.s32.totalorder %s131, %s134
    %p143 = scmp.eq.s32.totalorder %s16, 1
    %p144 = por %p142, %p143
    %p145 = scmp.ne.s32.totalorder %s134, %s135
    %p146 = scmp.eq.s32.totalorder %s16, 0
    %p147 = por %p145, %p146
    %p148 = scmp.ne.s32.totalorder %s134, %s135
    %p149 = scmp.eq.s32.totalorder %s17, 1
    %p150 = por %p148, %p149
    %p152 = scmp.ne.s32.totalorder %s135, %s151
    %p153 = scmp.eq.s32.totalorder %s17, 0
    %p154 = por %p152, %p153
    %p155 = scmp.le.s32.totalorder 1, %s11
    %p156 = scmp.lt.s32.totalorder %s11, 3
    %p157 = pnand %p155, %p156
    %p158 = pneg %p157
    // Predicated region
    $region9: #{tcn_decoder_forward.1} parent=5 // pred_check
      _
    $region10: #{tcn_decoder_forward.1} parent=5 // pred_check_branch
      %160 = sbr.rel (%p157) target = $region12
    $region11: #{tcn_decoder_forward.1} parent=5 // pred_region
      %s161 = ssub.s32 %s11, 1
      // Predicated region
      $region13: #{tcn_decoder_forward.1} parent=11 // pred_check
        %p162 = pneg %p58
      $region14: #{tcn_decoder_forward.1} parent=11 // pred_check_branch
        %164 = sbr.rel (%p162) target = $region16
      $region15: #{tcn_decoder_forward.1} parent=11 // pred_region
        _
      $region16: #{tcn_decoder_forward.1} parent=11 // pred_fallthru
        _
      // Predicated region
      $region17: #{tcn_decoder_forward.1} parent=11 // pred_check
        %p165 = pneg %p79
      $region18: #{tcn_decoder_forward.1} parent=11 // pred_check_branch
        %167 = sbr.rel (%p165) target = $region20
      $region19: #{tcn_decoder_forward.1} parent=11 // pred_region
        _
      $region20: #{tcn_decoder_forward.1} parent=11 // pred_fallthru
        _
      // Predicated region
      $region21: #{tcn_decoder_forward.1} parent=11 // pred_check
        %p168 = pneg %p100
      $region22: #{tcn_decoder_forward.1} parent=11 // pred_check_branch
        %170 = sbr.rel (%p168) target = $region24
      $region23: #{tcn_decoder_forward.1} parent=11 // pred_region
        _
      $region24: #{tcn_decoder_forward.1} parent=11 // pred_fallthru
        _
      // Predicated region
      $region25: #{tcn_decoder_forward.1} parent=11 // pred_check
        %p171 = pneg %p121
      $region26: #{tcn_decoder_forward.1} parent=11 // pred_check_branch
        %173 = sbr.rel (%p171) target = $region28
      $region27: #{tcn_decoder_forward.1} parent=11 // pred_region
        _
      $region28: #{tcn_decoder_forward.1} parent=11 // pred_fallthru
        _
    $region12: #{tcn_decoder_forward.1} parent=5 // pred_fallthru
      _
    %p174 = scmp.lt.s32.totalorder %s11, 2
    // Predicated region
    $region29: #{tcn_decoder_forward.1} parent=5 // pred_check
      %p175 = pneg %p174
    $region30: #{tcn_decoder_forward.1} parent=5 // pred_check_branch
      %177 = sbr.rel (%p175) target = $region32
    $region31: #{tcn_decoder_forward.1} parent=5 // pred_region
      // Predicated region
      $region33: #{tcn_decoder_forward.1} parent=31 // pred_check
        %p178 = pneg %p31
      $region34: #{tcn_decoder_forward.1} parent=31 // pred_check_branch
        %180 = sbr.rel (%p178) target = $region36
      $region35: #{tcn_decoder_forward.1} parent=31 // pred_region
        %p181 = scmp.lt.s32.totalorder %s11, 1
        %s182 = scalar_select %p181, %s11, 1
        %s183 = smul.addr %s182, 3
        %s184 = smul.addr %s183, 4
        %s185 = scalar_lea.vmem %s0, %s184
      $region36: #{tcn_decoder_forward.1} parent=31 // pred_fallthru
        _
    $region32: #{tcn_decoder_forward.1} parent=5 // pred_fallthru
      _
    %p186 = scmp.le.s32.totalorder 1, %s11
    %p187 = scmp.lt.s32.totalorder %s11, 3
    %p188 = pnand %p186, %p187
    %p189 = pneg %p188
    // Predicated region
    $region37: #{tcn_decoder_forward.1} parent=5 // pred_check
      _
    $region38: #{tcn_decoder_forward.1} parent=5 // pred_check_branch
      %191 = sbr.rel (%p188) target = $region40
    $region39: #{tcn_decoder_forward.1} parent=5 // pred_region
      %s192 = ssub.s32 %s11, 1
      %p193 = scmp.lt.s32.totalorder %s16, 1
      %s194 = scalar_select %p193, %s16, 1
      %s195 = smul.addr %s194, 3
      %s196 = smul.addr %s195, 4
      %s197 = scalar_lea.vmem %s0, %s196
      %p198 = pneg %p37
      %p199 = pneg %p34
      %p200 = pneg %p58
      %p201 = pneg %p55
      %p202 = pneg %p79
      %p203 = pneg %p76
      %p204 = pneg %p100
      %p205 = pneg %p97
      %p206 = pneg %p121
      %p207 = pneg %p118
      %p208 = pneg %p147
      %p209 = pneg %p144
      %p210 = scmp.lt.s32.totalorder %s16, 1
      %s211 = scalar_select %p210, %s16, 1
      %s212 = smul.addr %s211, 2
      %s213 = smul.addr %s212, 8
      %s214 = scalar_lea.vmem %s5, %s213
      %p215 = scmp.lt.s32.totalorder %s16, 1
      %s216 = scalar_select %p215, %s16, 1
      %s217 = smul.addr %s216, 3
      %s218 = smul.addr %s217, 4
      %s219 = scalar_lea.vmem %s0, %s218
      %p220 = scmp.lt.s32.totalorder %s16, 1
      %s221 = scalar_select %p220, %s16, 1
      %s222 = smul.addr %s221, 2
      %s223 = smul.addr %s222, 8
      %s224 = scalar_lea.vmem %s5, %s223
      %v225 = vld [vmem:[%s219] sm:$0xf]
      %v226 = vld [vmem:[%s219 + $0x4] sm:$0xf]
      %v227 = vld [vmem:[%s219 + $0x8] sm:$0x1]
      %v228 = vunpack.c.l.bf16 %v225
      %v229 = vunpack.c.l.bf16 %v226
      %v230 = vunpack.c.l.bf16 %v227
      %v231 = vld [vmem:[%s1] sm:$0xff]
      %v232 = vld [vmem:[%s1 + $0x8] sm:$0xff]
      %v233 = vld [vmem:[%s1 + $0x10] sm:$0xff]
      %v234 = vld [vmem:[%s1 + $0x18] sm:$0xff]
      %v235 = vld [vmem:[%s2] sm:$0xff]
      %v236 = vld [vmem:[%s2 + $0x8] sm:$0xff]
      %v237 = vld [vmem:[%s2 + $0x10] sm:$0xff]
      %v238 = vld [vmem:[%s2 + $0x18] sm:$0xff]
      %vm239 = vcmask 261120
      %v241 = vsel %vm239, %v228, 0
      %v244 = vsel %vm239, %v229, 0
      %246 = vmatprep.subr.mxu0 0.0
      %247 = vmatpush1.msra.mxu0 %v235
      %248 = vmatprep.subr.mxu0 0.0
      %249 = vmatpush1.msra.mxu0 %v236
      %250 = vmatprep.subr.mxu0 0.0
      %251 = vmatpush1.msra.mxu0 %v237
      %252 = vmatprep.subr.mxu0 0.0
      %253 = vmatpush1.msra.mxu0 %v238
      %254 = vmatprep.subr.mxu0 0.0
      %255 = vmatpush1.msra.mxu0 0.0
      %256 = vmatprep.subr.mxu0 0.0
      %257 = vmatpush1.msra.mxu0 0.0
      %258 = vmatprep.subr.mxu0 0.0
      %259 = vmatpush1.msra.mxu0 0.0
      %260 = vmatprep.subr.mxu0 0.0
      %261 = vmatpush1.msra.mxu0 0.0
      %262 = vmatprep.subr.mxu0 0.0
      %263 = vmatpush1.msra.mxu0 0.0
      %264 = vmatprep.subr.mxu0 0.0
      %265 = vmatpush1.msra.mxu0 0.0
      %266 = vmatprep.subr.mxu0 0.0
      %267 = vmatpush1.msra.mxu0 0.0
      %268 = vmatprep.subr.mxu0 0.0
      %269 = vmatpush1.msra.mxu0 0.0
      %270 = vmatprep.subr.mxu0 0.0
      %271 = vmatpush1.msra.mxu0 0.0
      %272 = vmatprep.subr.mxu0 0.0
      %273 = vmatpush1.msra.mxu0 0.0
      %274 = vmatprep.subr.mxu0 0.0
      %275 = vmatpush1.msra.mxu0 0.0
      %276 = vmatprep.subr.mxu0 0.0
      %277 = vmatpush1.msra.mxu0 0.0
      %278 = vmatprep.subr.mxu0 0.0
      %279 = vmatpush1.msra.mxu0 0.0
      %280 = vmatprep.subr.mxu0 0.0
      %281 = vmatpush1.msra.mxu0 0.0
      %282 = vmatprep.subr.mxu0 0.0
      %283 = vmatpush1.msra.mxu0 0.0
      %284 = vmatprep.subr.mxu0 0.0
      %285 = vmatpush1.msra.mxu0 0.0
      %286 = vmatprep.subr.mxu0 0.0
      %287 = vmatpush1.msra.mxu0 0.0
      %288 = vmatprep.subr.mxu0 0.0
      %289 = vmatpush1.msra.mxu0 0.0
      %290 = vmatprep.subr.mxu0 0.0
      %291 = vmatpush1.msra.mxu0 0.0
      %292 = vmatprep.subr.mxu0 0.0
      %293 = vmatpush1.msra.mxu0 0.0
      %294 = vmatprep.subr.mxu0 0.0
      %295 = vmatpush1.msra.mxu0 0.0
      %296 = vmatprep.subr.mxu0 0.0
      %297 = vmatpush1.msra.mxu0 0.0
      %298 = vmatprep.subr.mxu0 0.0
      %299 = vmatpush1.msra.mxu0 0.0
      %300 = vmatprep.subr.mxu0 0.0
      %301 = vmatpush1.msra.mxu0 0.0
      %302 = vmatprep.subr.mxu0 0.0
      %303 = vmatpush1.msra.mxu0 0.0
      %304 = vmatprep.subr.mxu0 0.0
      %305 = vmatpush1.msra.mxu0 0.0
      %306 = vmatprep.subr.mxu0 0.0
      %307 = vmatpush1.msra.mxu0 0.0
      %308 = vmatprep.subr.mxu0 0.0
      %309 = vmatpush1.msra.mxu0 0.0
      %310 = vmatprep.mubr.f32.mxu0 0.0
      %311 = vmatmul.mubr.f32.gmra.mrb[0].mxu0 %v241
      %v312 = vpop.f32.mrb[0].mxu0
      %v313 = vadd.f32 0.0, %v312
      %v314 = vpop.f32.mrb[0].mxu0
      %315 = vmatprep.mubr.f32.mxu0 0.0
      %316 = vmatmul.mubr.f32.gmra.mrb[0].mxu0 %v244
      %v317 = vpop.f32.mrb[0].mxu0
      %v318 = vadd.f32 0.0, %v317
      %v319 = vpop.f32.mrb[0].mxu0
      %320 = vdwg.mxu0
      %vm322 = vcmask 1046528
      %v323 = vrot.slane %v228, 1
      %v324 = vrot.slane %v229, 1
      %v325 = vsel %vm322, %v323, %v324
      %v326 = vrot.slane %v230, 1
      %v327 = vsel %vm322, %v324, %v326
      %v328 = vsel %vm239, %v325, 0
      %v330 = vsel %vm239, %v327, 0
      %332 = vmatprep.subr.mxu0 0.0
      %333 = vmatpush1.msra.mxu0 %v231
      %334 = vmatprep.subr.mxu0 0.0
      %335 = vmatpush1.msra.mxu0 %v232
      %336 = vmatprep.subr.mxu0 0.0
      %337 = vmatpush1.msra.mxu0 %v233
      %338 = vmatprep.subr.mxu0 0.0
      %339 = vmatpush1.msra.mxu0 %v234
      %340 = vmatprep.subr.mxu0 0.0
      %341 = vmatpush1.msra.mxu0 0.0
      %342 = vmatprep.subr.mxu0 0.0
      %343 = vmatpush1.msra.mxu0 0.0
      %344 = vmatprep.subr.mxu0 0.0
      %345 = vmatpush1.msra.mxu0 0.0
      %346 = vmatprep.subr.mxu0 0.0
      %347 = vmatpush1.msra.mxu0 0.0
      %348 = vmatprep.subr.mxu0 0.0
      %349 = vmatpush1.msra.mxu0 0.0
      %350 = vmatprep.subr.mxu0 0.0
      %351 = vmatpush1.msra.mxu0 0.0
      %352 = vmatprep.subr.mxu0 0.0
      %353 = vmatpush1.msra.mxu0 0.0
      %354 = vmatprep.subr.mxu0 0.0
      %355 = vmatpush1.msra.mxu0 0.0
      %356 = vmatprep.subr.mxu0 0.0
      %357 = vmatpush1.msra.mxu0 0.0
      %358 = vmatprep.subr.mxu0 0.0
      %359 = vmatpush1.msra.mxu0 0.0
      %360 = vmatprep.subr.mxu0 0.0
      %361 = vmatpush1.msra.mxu0 0.0
      %362 = vmatprep.subr.mxu0 0.0
      %363 = vmatpush1.msra.mxu0 0.0
      %364 = vmatprep.subr.mxu0 0.0
      %365 = vmatpush1.msra.mxu0 0.0
      %366 = vmatprep.subr.mxu0 0.0
      %367 = vmatpush1.msra.mxu0 0.0
      %368 = vmatprep.subr.mxu0 0.0
      %369 = vmatpush1.msra.mxu0 0.0
      %370 = vmatprep.subr.mxu0 0.0
      %371 = vmatpush1.msra.mxu0 0.0
      %372 = vmatprep.subr.mxu0 0.0
      %373 = vmatpush1.msra.mxu0 0.0
      %374 = vmatprep.subr.mxu0 0.0
      %375 = vmatpush1.msra.mxu0 0.0
      %376 = vmatprep.subr.mxu0 0.0
      %377 = vmatpush1.msra.mxu0 0.0
      %378 = vmatprep.subr.mxu0 0.0
      %379 = vmatpush1.msra.mxu0 0.0
      %380 = vmatprep.subr.mxu0 0.0
      %381 = vmatpush1.msra.mxu0 0.0
      %382 = vmatprep.subr.mxu0 0.0
      %383 = vmatpush1.msra.mxu0 0.0
      %384 = vmatprep.subr.mxu0 0.0
      %385 = vmatpush1.msra.mxu0 0.0
      %386 = vmatprep.subr.mxu0 0.0
      %387 = vmatpush1.msra.mxu0 0.0
      %388 = vmatprep.subr.mxu0 0.0
      %389 = vmatpush1.msra.mxu0 0.0
      %390 = vmatprep.subr.mxu0 0.0
      %391 = vmatpush1.msra.mxu0 0.0
      %392 = vmatprep.subr.mxu0 0.0
      %393 = vmatpush1.msra.mxu0 0.0
      %394 = vmatprep.subr.mxu0 0.0
      %395 = vmatpush1.msra.mxu0 0.0
      %396 = vmatprep.mubr.f32.mxu0 0.0
      %397 = vmatmul.mubr.f32.gmra.mrb[0].mxu0 %v328
      %v398 = vpop.f32.mrb[0].mxu0
      %v399 = vadd.f32 %v313, %v398
      %v400 = vpop.f32.mrb[0].mxu0
      %401 = vmatprep.mubr.f32.mxu0 0.0
      %402 = vmatmul.mubr.f32.gmra.mrb[0].mxu0 %v330
      %v403 = vpop.f32.mrb[0].mxu0
      %v404 = vadd.f32 %v318, %v403
      %v405 = vpop.f32.mrb[0].mxu0
      %406 = vdwg.mxu0
      %v407 = vld [vmem:[%s3] sm:$0xff]
      %v408 = vld [vmem:[%s3 + $0x8] sm:$0xff]
      %v409 = vld [vmem:[%s3 + $0x10] sm:$0xff]
      %v410 = vld [vmem:[%s3 + $0x18] sm:$0xff]
      %vm411 = vcmask 1045504
      %v412 = vrot.slane %v228, 2
      %v413 = vrot.slane %v229, 2
      %v414 = vsel %vm411, %v412, %v413
      %v415 = vrot.slane %v230, 2
      %v416 = vsel %vm411, %v413, %v415
      %v417 = vsel %vm239, %v414, 0
      %v419 = vsel %vm239, %v416, 0
      %421 = vmatprep.subr.mxu0 0.0
      %422 = vmatpush1.msra.mxu0 %v407
      %423 = vmatprep.subr.mxu0 0.0
      %424 = vmatpush1.msra.mxu0 %v408
      %425 = vmatprep.subr.mxu0 0.0
      %426 = vmatpush1.msra.mxu0 %v409
      %427 = vmatprep.subr.mxu0 0.0
      %428 = vmatpush1.msra.mxu0 %v410
      %429 = vmatprep.subr.mxu0 0.0
      %430 = vmatpush1.msra.mxu0 0.0
      %431 = vmatprep.subr.mxu0 0.0
      %432 = vmatpush1.msra.mxu0 0.0
      %433 = vmatprep.subr.mxu0 0.0
      %434 = vmatpush1.msra.mxu0 0.0
      %435 = vmatprep.subr.mxu0 0.0
      %436 = vmatpush1.msra.mxu0 0.0
      %437 = vmatprep.subr.mxu0 0.0
      %438 = vmatpush1.msra.mxu0 0.0
      %439 = vmatprep.subr.mxu0 0.0
      %440 = vmatpush1.msra.mxu0 0.0
      %441 = vmatprep.subr.mxu0 0.0
      %442 = vmatpush1.msra.mxu0 0.0
      %443 = vmatprep.subr.mxu0 0.0
      %444 = vmatpush1.msra.mxu0 0.0
      %445 = vmatprep.subr.mxu0 0.0
      %446 = vmatpush1.msra.mxu0 0.0
      %447 = vmatprep.subr.mxu0 0.0
      %448 = vmatpush1.msra.mxu0 0.0
      %449 = vmatprep.subr.mxu0 0.0
      %450 = vmatpush1.msra.mxu0 0.0
      %451 = vmatprep.subr.mxu0 0.0
      %452 = vmatpush1.msra.mxu0 0.0
      %453 = vmatprep.subr.mxu0 0.0
      %454 = vmatpush1.msra.mxu0 0.0
      %455 = vmatprep.subr.mxu0 0.0
      %456 = vmatpush1.msra.mxu0 0.0
      %457 = vmatprep.subr.mxu0 0.0
      %458 = vmatpush1.msra.mxu0 0.0
      %459 = vmatprep.subr.mxu0 0.0
      %460 = vmatpush1.msra.mxu0 0.0
      %461 = vmatprep.subr.mxu0 0.0
      %462 = vmatpush1.msra.mxu0 0.0
      %463 = vmatprep.subr.mxu0 0.0
      %464 = vmatpush1.msra.mxu0 0.0
      %465 = vmatprep.subr.mxu0 0.0
      %466 = vmatpush1.msra.mxu0 0.0
      %467 = vmatprep.subr.mxu0 0.0
      %468 = vmatpush1.msra.mxu0 0.0
      %469 = vmatprep.subr.mxu0 0.0
      %470 = vmatpush1.msra.mxu0 0.0
      %471 = vmatprep.subr.mxu0 0.0
      %472 = vmatpush1.msra.mxu0 0.0
      %473 = vmatprep.subr.mxu0 0.0
      %474 = vmatpush1.msra.mxu0 0.0
      %475 = vmatprep.subr.mxu0 0.0
      %476 = vmatpush1.msra.mxu0 0.0
      %477 = vmatprep.subr.mxu0 0.0
      %478 = vmatpush1.msra.mxu0 0.0
      %479 = vmatprep.subr.mxu0 0.0
      %480 = vmatpush1.msra.mxu0 0.0
      %481 = vmatprep.subr.mxu0 0.0
      %482 = vmatpush1.msra.mxu0 0.0
      %483 = vmatprep.subr.mxu0 0.0
      %484 = vmatpush1.msra.mxu0 0.0
      %485 = vmatprep.mubr.f32.mxu0 0.0
      %486 = vmatmul.mubr.f32.gmra.mrb[0].mxu0 %v417
      %v487 = vpop.f32.mrb[0].mxu0
      %v488 = vadd.f32 0.0, %v487
      %v489 = vpop.f32.mrb[0].mxu0
      %490 = vmatprep.mubr.f32.mxu0 0.0
      %491 = vmatmul.mubr.f32.gmra.mrb[0].mxu0 %v419
      %v492 = vpop.f32.mrb[0].mxu0
      %v493 = vadd.f32 0.0, %v492
      %v494 = vpop.f32.mrb[0].mxu0
      %495 = vdwg.mxu0
      %v496 = vadd.f32 %v399, %v488
      %v497 = vadd.f32 %v404, %v493
      %v498 = vld [vmem:[%s4] sm:$0x1]
      %v500 = vlaneseq
      %v501 = vshrl.u32 %v500, 7
      %v502 = vsub.s32 0, %v501
      %v503 = vrot.slane %v498, %v502
      %v505 = vadd.f32 %v496, %v503
      %v506 = vadd.f32 %v497, %v503
      %v507 = vmax.f32 %v505, 0.0
      %v508 = vmax.f32 %v506, 0.0
      %509 = vst [vmem:[%s224] sm:$0xff] %v507
      %510 = vst [vmem:[%s224 + $0x8] sm:$0xff] %v508
      %p511 = scmp.lt.s32.totalorder %s16, 1
      %s512 = scalar_select %p511, %s16, 1
      %s513 = smul.addr %s512, 2
      %s514 = smul.addr %s513, 8
      %s515 = scalar_lea.vmem %s5, %s514
      // Predicated region
      $region41: #{tcn_decoder_forward.1} parent=39 // pred_check
        %p516 = pneg %p144
      $region42: #{tcn_decoder_forward.1} parent=39 // pred_check_branch
        %518 = sbr.rel (%p516) target = $region44
      $region43: #{tcn_decoder_forward.1} parent=39 // pred_region
        _
      $region44: #{tcn_decoder_forward.1} parent=39 // pred_fallthru
        _
    $region40: #{tcn_decoder_forward.1} parent=5 // pred_fallthru
      _
    %p519 = scmp.le.s32.totalorder 2, %s11
    // Predicated region
    $region45: #{tcn_decoder_forward.1} parent=5 // pred_check
      %p520 = pneg %p519
    $region46: #{tcn_decoder_forward.1} parent=5 // pred_check_branch
      %522 = sbr.rel (%p520) target = $region48
    $region47: #{tcn_decoder_forward.1} parent=5 // pred_region
      %s523 = ssub.s32 %s11, 2
      // Predicated region
      $region49: #{tcn_decoder_forward.1} parent=47 // pred_check
        %p524 = pneg %p150
      $region50: #{tcn_decoder_forward.1} parent=47 // pred_check_branch
        %526 = sbr.rel (%p524) target = $region52
      $region51: #{tcn_decoder_forward.1} parent=47 // pred_region
        %p527 = scmp.lt.s32.totalorder %s17, 1
        %s528 = scalar_select %p527, %s17, 1
        %s529 = smul.addr %s528, 2
        %s530 = smul.addr %s529, 8
        %s531 = scalar_lea.vmem %s5, %s530
      $region52: #{tcn_decoder_forward.1} parent=47 // pred_fallthru
        _
    $region48: #{tcn_decoder_forward.1} parent=5 // pred_fallthru
      _
  $region6: #{tcn_decoder_forward.1} parent=0 // loop_footer
    %s15 = sadd.s32 1, %s11
  $region7: #{tcn_decoder_forward.1} parent=0 // loop_footer_branch
    %10 = sbr.rel target = $region3
  $region8: #{tcn_decoder_forward.1} parent=0 // loop_exit
    _

</llo_original>
